<compile_context>
chip_gen: v7x
topology: tpu7x:2x2x1
jax: 0.10.0
libtpu: 0.0.40
codegen_flags: <defaults>
</compile_context>

<pallas_src>
import jax
import jax.numpy as jnp
from jax.experimental import pallas as pl
from jax.experimental.pallas import tpu as pltpu

INPFT, OUTFT, K1, K2 = 5, 5, 16, 12

_SUBLANE = 8
_LANE = 128
_MAX_TQ = 512                  # score-tile rows  (multiple of 8)
_MAX_TC = 2048                 # score-tile cols  (multiple of 128)
_EMBED_BLOCK_BYTES = 2 << 20   # per-buffer byte budget for the embed input block
_MAX_EMBED_TILE = 512
_SCORE_VMEM_LIMIT = 48 << 20   # raised scoped-VMEM limit (safe on v5e/v6e/v7x)


def _round_up(x, m):
    return ((x + m - 1) // m) * m


def _pick_tile(n, unit, max_tile):
    """Tile for one axis: full (possibly unaligned) extent if it fits in one tile,
    otherwise a `unit`-aligned, balanced tile <= max_tile with a ragged last block
    (dead work bounded by < unit per axis instead of < tile)."""
    n = max(int(n), 1)
    if n <= max_tile:
        return n
    n_tiles = pl.cdiv(n, max_tile)
    return _round_up(pl.cdiv(n, n_tiles), unit)


def _embed_tile(n, items):
    cap = _EMBED_BLOCK_BYTES // max(items * INPFT * 4, 1)
    cap = max(_SUBLANE, min(_MAX_EMBED_TILE, (cap // _SUBLANE) * _SUBLANE))
    return _pick_tile(n, _SUBLANE, cap)


# ----------------------------- embedding pass ------------------------------

def embed_kernel(x_ref, w1_ref, b1_ref, w2_ref, b2_ref, w3_ref, b3_ref, out_ref):
    """Fused per-set item sum + MLP: (TN, items, inpft) -> (TN, outft)."""
    x = jnp.sum(x_ref[...], axis=1)                                         # (TN, inpft)
    h = jnp.dot(x, w1_ref[...], preferred_element_type=jnp.float32) + b1_ref[...]
    h = jnp.maximum(h, 0.0)
    h = jnp.dot(h, w2_ref[...], preferred_element_type=jnp.float32) + b2_ref[...]
    out_ref[...] = (
        jnp.dot(h, w3_ref[...], preferred_element_type=jnp.float32) + b3_ref[...]
    )


def _embed(sets, params):
    """sets: (N, items, inpft) -> embeddings (N, outft) f32.  No pre-padding; the
    ragged last block (if any) is masked by the pipeline."""
    n, items, f = sets.shape
    x = sets.astype(jnp.float32)
    tile_n = _embed_tile(n, items)
    w_keys = ("w1", "b1", "w2", "b2", "w3", "b3")
    w_specs = [pl.BlockSpec(params[k].shape, lambda i: (0, 0)) for k in w_keys]
    return pl.pallas_call(
        embed_kernel,
        out_shape=jax.ShapeDtypeStruct((n, OUTFT), jnp.float32),
        grid=(pl.cdiv(n, tile_n),),
        in_specs=[pl.BlockSpec((tile_n, items, f), lambda i: (i, 0, 0))] + w_specs,
        out_specs=pl.BlockSpec((tile_n, OUTFT), lambda i: (i, 0)),
        compiler_params=pltpu.CompilerParams(dimension_semantics=("parallel",)),
    )(x, *(params[k] for k in w_keys))


# ----------------------------- pairwise score ------------------------------

def score_kernel(q_ref, ct_ref, o_ref):
    """scores[i, j] = Csum[j] - sum_d max(q[i, d], c[j, d]) on a lane-dense tile.

    q_ref : (TQ, OUTFT)   queries on sublanes
    ct_ref: (OUTFT, TC)   corpus on lanes (transposed embeddings)

    Exact identity with -sum_d ReLU(q_d - c_d):  ReLU(q - c) = max(q, c) - c.
    """
    q = q_ref[...]                                             # (TQ, OUTFT)
    rows = [ct_ref[d:d + 1, :] for d in range(OUTFT)]          # OUTFT x (1, TC)

    csum = rows[0]
    for d in range(1, OUTFT):
        csum = csum + rows[d]                                  # (1, TC)

    acc = jnp.maximum(q[:, 0:1], rows[0])                      # (TQ, TC)
    for d in range(1, OUTFT):                                  # unrolled: 1 vmax + 1 vadd / d
        acc = acc + jnp.maximum(q[:, d:d + 1], rows[d])

    o_ref[...] = (csum - acc).astype(o_ref.dtype)              # absorbs the negation


def qc_forward(query_sets, corpus_sets, params, out_dtype=jnp.float32):
    """query_sets: (Q, items_q, inpft), corpus_sets: (C, items_c, inpft) -> (Q, C).

    out_dtype=jnp.bfloat16 halves score store traffic (f32 accumulation is kept);
    only use it where the output contract allows reduced precision."""
    q_n, c_n = query_sets.shape[0], corpus_sets.shape[0]

    q_emb = _embed(query_sets, params)        # (Q, outft) f32
    c_emb = _embed(corpus_sets, params)       # (C, outft) f32
    c_emb_t = c_emb.T                         # (outft, C) -- tiny XLA layout glue

    tq = _pick_tile(q_n, _SUBLANE, _MAX_TQ)
    tc = _pick_tile(c_n, _LANE, _MAX_TC)
    # v7x has 2 TensorCores: make sure a ('parallel','parallel') grid has >= 2 tiles.
    if pl.cdiv(q_n, tq) * pl.cdiv(c_n, tc) < 2 and c_n >= 2 * _LANE:
        tc = _round_up(pl.cdiv(c_n, 2), _LANE)

    return pl.pallas_call(
        score_kernel,
        out_shape=jax.ShapeDtypeStruct((q_n, c_n), out_dtype),
        grid=(pl.cdiv(q_n, tq), pl.cdiv(c_n, tc)),
        in_specs=[pl.BlockSpec((tq, OUTFT), lambda i, j: (i, 0)),
                  pl.BlockSpec((OUTFT, tc), lambda i, j: (0, j))],
        out_specs=pl.BlockSpec((tq, tc), lambda i, j: (i, j)),
        compiler_params=pltpu.CompilerParams(
            dimension_semantics=("parallel", "parallel"),
            vmem_limit_bytes=_SCORE_VMEM_LIMIT),
    )(q_emb, c_emb_t)


# ------------------------------- reference ---------------------------------

def ref_forward(query_sets, corpus_sets, p):
    """Pure-JAX reference of QCModel.forward semantics."""
    def mlp(x):
        h = jnp.maximum(x @ p["w1"] + p["b1"], 0.0)
        h = h @ p["w2"] + p["b2"]
        return h @ p["w3"] + p["b3"]
    qe = mlp(jnp.sum(query_sets, axis=1))
    ce = mlp(jnp.sum(corpus_sets, axis=1))
    return -jnp.sum(jnp.maximum(qe[:, None, :] - ce[None, :, :], 0.0), axis=-1)


def init_params(key):
    """Deterministic init; weights stored (in, out) so x @ W matches torch's x @ W.T."""
    k1, k2, k3, k4, k5, k6 = jax.random.split(key, 6)
    def u(k, shape, fan_in):
        bound = 1.0 / jnp.sqrt(fan_in)
        return jax.random.uniform(k, shape, jnp.float32, -bound, bound)
    return {
        "w1": u(k1, (INPFT, K1), INPFT), "b1": u(k2, (1, K1), INPFT),
        "w2": u(k3, (K1, K2), K1),       "b2": u(k4, (1, K2), K1),
        "w3": u(k5, (K2, OUTFT), K2),    "b3": u(k6, (1, OUTFT), K2),
    }


if __name__ == "__main__":
    key = jax.random.PRNGKey(0)
    kp, kq, kc, kq2, kc2 = jax.random.split(key, 5)
    params = init_params(kp)

    # Small case: 3 query sets of 4 items, 4 corpus sets of 6 items, inpft=5.
    queries = jax.random.normal(kq, (3, 4, INPFT), jnp.float32)
    corpus = jax.random.normal(kc, (4, 6, INPFT), jnp.float32)
    scores = jax.block_until_ready(qc_forward(queries, corpus, params))
    expected = ref_forward(queries, corpus, params)
    assert scores.shape == (3, 4)
    assert jnp.allclose(scores, expected, atol=1e-4, rtol=1e-4), (scores, expected)

    # Ragged / multi-tile path: unaligned Q, corpus spanning two lane tiles.
    queries2 = jax.random.normal(kq2, (37, 3, INPFT), jnp.float32)
    corpus2 = jax.random.normal(kc2, (290, 6, INPFT), jnp.float32)
    scores2 = jax.block_until_ready(qc_forward(queries2, corpus2, params))
    expected2 = ref_forward(queries2, corpus2, params)
    assert scores2.shape == (37, 290)
    assert jnp.allclose(scores2, expected2, atol=1e-4, rtol=1e-4)

    # Optional reduced-precision output (halves score write traffic).
    scores_bf16 = jax.block_until_ready(
        qc_forward(queries, corpus, params, out_dtype=jnp.bfloat16))
    assert jnp.allclose(scores_bf16.astype(jnp.float32), expected, atol=3e-2, rtol=3e-2)

    print("KERNEL_OK")
</pallas_src>

<mosaic_0001>
module attributes {stable_mosaic.version = 11 : i64} {
  func.func @embed_kernel(%arg0: i32, %arg1: memref<3x4x5xf32, #tpu.memory_space<vmem>>, %arg2: memref<5x16xf32, #tpu.memory_space<vmem>>, %arg3: memref<1x16xf32, #tpu.memory_space<vmem>>, %arg4: memref<16x12xf32, #tpu.memory_space<vmem>>, %arg5: memref<1x12xf32, #tpu.memory_space<vmem>>, %arg6: memref<12x5xf32, #tpu.memory_space<vmem>>, %arg7: memref<1x5xf32, #tpu.memory_space<vmem>>, %arg8: memref<3x5xf32, #tpu.memory_space<vmem>>) attributes {dimension_semantics = [#tpu.dimension_semantics<parallel>], iteration_bounds = array<i64: 1>, scalar_prefetch = 0 : i64, scratch_operands = 0 : i64, tpu.core_type = #tpu.core_type<tc>, window_params = [{transform_indices = @transform_0, window_bounds = array<i64: 3, 4, 5>}, {pipeline_mode = #tpu.pipeline_mode<synchronous>, transform_indices = @transform_1, window_bounds = array<i64: 5, 16>}, {pipeline_mode = #tpu.pipeline_mode<synchronous>, transform_indices = @transform_2, window_bounds = array<i64: 1, 16>}, {pipeline_mode = #tpu.pipeline_mode<synchronous>, transform_indices = @transform_3, window_bounds = array<i64: 16, 12>}, {pipeline_mode = #tpu.pipeline_mode<synchronous>, transform_indices = @transform_4, window_bounds = array<i64: 1, 12>}, {pipeline_mode = #tpu.pipeline_mode<synchronous>, transform_indices = @transform_5, window_bounds = array<i64: 12, 5>}, {pipeline_mode = #tpu.pipeline_mode<synchronous>, transform_indices = @transform_6, window_bounds = array<i64: 1, 5>}, {transform_indices = @transform_7, window_bounds = array<i64: 3, 5>}]} {
    %c0 = arith.constant 0 : index
    %c0_0 = arith.constant 0 : index
    %c0_1 = arith.constant 0 : index
    %0 = vector.load %arg1[%c0, %c0_0, %c0_1] : memref<3x4x5xf32, #tpu.memory_space<vmem>>, vector<3x4x5xf32>
    %cst = arith.constant dense<0.000000e+00> : vector<3x5xf32>
    %1 = vector.multi_reduction <add>, %0, %cst [1] : vector<3x4x5xf32> to vector<3x5xf32>
    %c0_2 = arith.constant 0 : index
    %c0_3 = arith.constant 0 : index
    %2 = vector.load %arg2[%c0_2, %c0_3] : memref<5x16xf32, #tpu.memory_space<vmem>>, vector<5x16xf32>
    %cst_4 = arith.constant dense<0.000000e+00> : vector<3x16xf32>
    %3 = tpu.matmul %1, %2, %cst_4 {dimension_numbers = #tpu.dot_dimension_numbers<[1], [0], [0], [1], [0, 0, 1, 1], [], []>} : vector<3x5xf32>, vector<5x16xf32>, vector<3x16xf32> -> vector<3x16xf32>
    %c0_5 = arith.constant 0 : index
    %c0_6 = arith.constant 0 : index
    %4 = vector.load %arg3[%c0_5, %c0_6] : memref<1x16xf32, #tpu.memory_space<vmem>>, vector<1x16xf32>
    %5 = vector.broadcast %4 : vector<1x16xf32> to vector<3x16xf32>
    %6 = arith.addf %3, %5 : vector<3x16xf32>
    %cst_7 = arith.constant 0.000000e+00 : f32
    %7 = vector.broadcast %cst_7 : f32 to vector<3x16xf32>
    %8 = arith.maximumf %6, %7 : vector<3x16xf32>
    %c0_8 = arith.constant 0 : index
    %c0_9 = arith.constant 0 : index
    %9 = vector.load %arg4[%c0_8, %c0_9] : memref<16x12xf32, #tpu.memory_space<vmem>>, vector<16x12xf32>
    %cst_10 = arith.constant dense<0.000000e+00> : vector<3x12xf32>
    %10 = tpu.matmul %8, %9, %cst_10 {dimension_numbers = #tpu.dot_dimension_numbers<[1], [0], [0], [1], [0, 0, 1, 1], [], []>} : vector<3x16xf32>, vector<16x12xf32>, vector<3x12xf32> -> vector<3x12xf32>
    %c0_11 = arith.constant 0 : index
    %c0_12 = arith.constant 0 : index
    %11 = vector.load %arg5[%c0_11, %c0_12] : memref<1x12xf32, #tpu.memory_space<vmem>>, vector<1x12xf32>
    %12 = vector.broadcast %11 : vector<1x12xf32> to vector<3x12xf32>
    %13 = arith.addf %10, %12 : vector<3x12xf32>
    %c0_13 = arith.constant 0 : index
    %c0_14 = arith.constant 0 : index
    %14 = vector.load %arg6[%c0_13, %c0_14] : memref<12x5xf32, #tpu.memory_space<vmem>>, vector<12x5xf32>
    %cst_15 = arith.constant dense<0.000000e+00> : vector<3x5xf32>
    %15 = tpu.matmul %13, %14, %cst_15 {dimension_numbers = #tpu.dot_dimension_numbers<[1], [0], [0], [1], [0, 0, 1, 1], [], []>} : vector<3x12xf32>, vector<12x5xf32>, vector<3x5xf32> -> vector<3x5xf32>
    %c0_16 = arith.constant 0 : index
    %c0_17 = arith.constant 0 : index
    %16 = vector.load %arg7[%c0_16, %c0_17] : memref<1x5xf32, #tpu.memory_space<vmem>>, vector<1x5xf32>
    %17 = vector.broadcast %16 : vector<1x5xf32> to vector<3x5xf32>
    %18 = arith.addf %15, %17 : vector<3x5xf32>
    %c0_18 = arith.constant 0 : index
    %c0_19 = arith.constant 0 : index
    %19 = vector.load %arg8[%c0_18, %c0_19] : memref<3x5xf32, #tpu.memory_space<vmem>>, vector<3x5xf32>
    tpu.vector_store %arg8[%c0_18, %c0_19], %18 {strides = array<i32>} : memref<3x5xf32, #tpu.memory_space<vmem>>, vector<3x5xf32>,
    return
  }
  func.func @transform_0(%arg0: i32) -> (i32, i32, i32) {
    %c0_i32 = arith.constant 0 : i32
    %c0_i32_0 = arith.constant 0 : i32
    %c0_i32_1 = arith.constant 0 : i32
    return %arg0, %c0_i32, %c0_i32_0 : i32, i32, i32
  }
  func.func @transform_1(%arg0: i32) -> (i32, i32) {
    %c0_i32 = arith.constant 0 : i32
    %c0_i32_0 = arith.constant 0 : i32
    %c0_i32_1 = arith.constant 0 : i32
    return %c0_i32, %c0_i32_0 : i32, i32
  }
  func.func @transform_2(%arg0: i32) -> (i32, i32) {
    %c0_i32 = arith.constant 0 : i32
    %c0_i32_0 = arith.constant 0 : i32
    %c0_i32_1 = arith.constant 0 : i32
    return %c0_i32, %c0_i32_0 : i32, i32
  }
  func.func @transform_3(%arg0: i32) -> (i32, i32) {
    %c0_i32 = arith.constant 0 : i32
    %c0_i32_0 = arith.constant 0 : i32
    %c0_i32_1 = arith.constant 0 : i32
    return %c0_i32, %c0_i32_0 : i32, i32
  }
  func.func @transform_4(%arg0: i32) -> (i32, i32) {
    %c0_i32 = arith.constant 0 : i32
    %c0_i32_0 = arith.constant 0 : i32
    %c0_i32_1 = arith.constant 0 : i32
    return %c0_i32, %c0_i32_0 : i32, i32
  }
  func.func @transform_5(%arg0: i32) -> (i32, i32) {
    %c0_i32 = arith.constant 0 : i32
    %c0_i32_0 = arith.constant 0 : i32
    %c0_i32_1 = arith.constant 0 : i32
    return %c0_i32, %c0_i32_0 : i32, i32
  }
  func.func @transform_6(%arg0: i32) -> (i32, i32) {
    %c0_i32 = arith.constant 0 : i32
    %c0_i32_0 = arith.constant 0 : i32
    %c0_i32_1 = arith.constant 0 : i32
    return %c0_i32, %c0_i32_0 : i32, i32
  }
  func.func @transform_7(%arg0: i32) -> (i32, i32) {
    %c0_i32 = arith.constant 0 : i32
    %c0_i32_0 = arith.constant 0 : i32
    return %arg0, %c0_i32 : i32, i32
  }
}

</mosaic_0001>

<llo_original>
// kernel: tpu_custom_call.1
$region0: #{tpu_custom_call.1}
  #allocation0 [shape = 'u32[]', space=smem, size = 0x4, offset = 0x4, fixed_abs, tag = 'smem constant byte address 0x4 - core index']
  #allocation1 [shape = 'u32[144,128]{1,0:T(1,128)}', space=vmem, size = 0x12000, scoped, tag = 'internal scratch']
  %s0 = inlined_call_operand.vmem [shape: f32[3,4,5], index: 0, kind: input, shape index: {}]
  %s1 = inlined_call_operand.hbm [shape: f32[5,16], index: 1, kind: input, shape index: {}]
  %s2 = inlined_call_operand.vmem [shape: f32[1,16], index: 2, kind: input, shape index: {}]
  %s3 = inlined_call_operand.vmem [shape: f32[16,12], index: 3, kind: input, shape index: {}]
  %s4 = inlined_call_operand.vmem [shape: f32[1,12], index: 4, kind: input, shape index: {}]
  %s5 = inlined_call_operand.vmem [shape: f32[12,5], index: 5, kind: input, shape index: {}]
  %s6 = inlined_call_operand.vmem [shape: f32[1,5], index: 6, kind: input, shape index: {}]
  %s7 = inlined_call_operand.hbm [shape: f32[3,5], index: 7, kind: output, shape index: {}]
  %s8 = sld [smem:[#allocation0]]
  $region42: #{tpu_custom_call.1} parent=0
    _
  %s10 = ssub.s32 1, %s8
  %s11 = scalar_select 0, %s10, %s8
  $region1: #{tpu_custom_call.1} parent=0
    #allocation2 [shape = 'u8[4096]{0}', space=vmem, size = 0x1000, scoped, tag = 'input window, operand 1, single buffered']
    #allocation3 [shape = 's32[1]{0}', space=sflag, size = 0x4, scoped, tag = 'scoped memory for tpu_custom_call.1']
    #allocation4 [shape = 's32[1]{0}', space=sflag, size = 0x4, scoped, tag = 'scoped memory for tpu_custom_call.1']
    #allocation5 [shape = 'u8[2048]{0}', space=vmem, size = 0x800, scoped, tag = 'output window, operand 0, single buffered']
    %12 = vsyncpa [#allocation3], 0
    %13 = vsyncpa [#allocation4], 0
    // Predicated region
    $region2: #{tpu_custom_call.1} parent=1 // pred_check
      _
    $region3: #{tpu_custom_call.1} parent=1 // pred_check_branch
      %15 = sbr.rel (0) target = $region5
    $region4: #{tpu_custom_call.1} parent=1 // pred_region
      _
    $region5: #{tpu_custom_call.1} parent=1 // pred_fallthru
      _
    // Predicated region
    $region6: #{tpu_custom_call.1} parent=1 // pred_check
      _
    $region7: #{tpu_custom_call.1} parent=1 // pred_check_branch
      %17 = sbr.rel (0) target = $region9
    $region8: #{tpu_custom_call.1} parent=1 // pred_region
      %s19 = ssub.s32 128, 128
      %20 = vsyncadd [#allocation3], %s19
      %s22 = sshll.u32 [#allocation2], 4
      %s23 = int_to_ptr.vmem [resolvable:$true] %s22
      %25 = dma.hbm_to_vmem [thread:$0]  %s1, 128, %s23, [#allocation3]
    $region9: #{tpu_custom_call.1} parent=1 // pred_fallthru
      _
    // Predicated region
    $region10: #{tpu_custom_call.1} parent=1 // pred_check
      _
    $region11: #{tpu_custom_call.1} parent=1 // pred_check_branch
      %27 = sbr.rel (0) target = $region13
    $region12: #{tpu_custom_call.1} parent=1 // pred_region
      _
    $region13: #{tpu_custom_call.1} parent=1 // pred_fallthru
      _
    // Predicated region
    $region14: #{tpu_custom_call.1} parent=1 // pred_check
      _
    $region15: #{tpu_custom_call.1} parent=1 // pred_check_branch
      %29 = sbr.rel (0) target = $region17
    $region16: #{tpu_custom_call.1} parent=1 // pred_region
      _
    $region17: #{tpu_custom_call.1} parent=1 // pred_fallthru
      _
    // Predicated region
    $region18: #{tpu_custom_call.1} parent=1 // pred_check
      _
    $region19: #{tpu_custom_call.1} parent=1 // pred_check_branch
      %31 = sbr.rel (0) target = $region21
    $region20: #{tpu_custom_call.1} parent=1 // pred_region
      _
    $region21: #{tpu_custom_call.1} parent=1 // pred_fallthru
      _
    // Predicated region
    $region22: #{tpu_custom_call.1} parent=1 // pred_check
      _
    $region23: #{tpu_custom_call.1} parent=1 // pred_check_branch
      %33 = sbr.rel (0) target = $region25
    $region24: #{tpu_custom_call.1} parent=1 // pred_region
      _
    $region25: #{tpu_custom_call.1} parent=1 // pred_fallthru
      _
    // Predicated region
    $region26: #{tpu_custom_call.1} parent=1 // pred_check
      _
    $region27: #{tpu_custom_call.1} parent=1 // pred_check_branch
      %35 = sbr.rel (0) target = $region29
    $region28: #{tpu_custom_call.1} parent=1 // pred_region
      _
    $region29: #{tpu_custom_call.1} parent=1 // pred_fallthru
      _
    // Predicated region
    $region30: #{tpu_custom_call.1} parent=1 // pred_check
      _
    $region31: #{tpu_custom_call.1} parent=1 // pred_check_branch
      %37 = sbr.rel (0) target = $region33
    $region32: #{tpu_custom_call.1} parent=1 // pred_region
      %38 = dma.done [#allocation3], 128
    $region33: #{tpu_custom_call.1} parent=1 // pred_fallthru
      _
    %v39 = vld [vmem:[%s0] sm:$0xf]
    %v40 = vld [vmem:[%s0 + $0x4] sm:$0xf]
    %v41 = vld [vmem:[%s0 + $0x8] sm:$0xf]
    %vm42 = vcmask 35840
    %v43 = vsel %vm42, %v39, 0.0
    %v44 = vrot.slane %v43, 4
    %v45 = vadd.f32 %v43, %v44
    %v46 = vrot.slane %v45, 2
    %v47 = vadd.f32 %v45, %v46
    %v48 = vrot.slane %v47, 1
    %v49 = vadd.f32 %v47, %v48
    %v50 = vsel %vm42, %v40, 0.0
    %v51 = vrot.slane %v50, 4
    %v52 = vadd.f32 %v50, %v51
    %v53 = vrot.slane %v52, 2
    %v54 = vadd.f32 %v52, %v53
    %v55 = vrot.slane %v54, 1
    %v56 = vadd.f32 %v54, %v55
    %v57 = vsel %vm42, %v41, 0.0
    %v58 = vrot.slane %v57, 4
    %v59 = vadd.f32 %v57, %v58
    %v60 = vrot.slane %v59, 2
    %v61 = vadd.f32 %v59, %v60
    %v62 = vrot.slane %v61, 1
    %v63 = vadd.f32 %v61, %v62
    %v64 = vld [vmem:[#allocation2] sm:$0x1f]
    %v65 = vld [vmem:[%s2] sm:$0x1]
    %v67 = vlaneseq
    %v68 = vshrl.u32 %v67, 7
    %v69 = vsub.s32 0, %v68
    %v70 = vrot.slane %v65, %v69
    %vm75 = vcmask 1041409
    %v76 = vsel %vm75, %v56, %v49
    %vm77 = vcmask 1042434
    %v78 = vsel %vm77, %v63, %v76
    %vm79 = vcmask 39936
    %v80 = vsel %vm79, %v78, 0
    %vm82 = vcmask 1044480
    %v84 = vsel %vm82, %v64, 0
    %86 = vmatprep.subr.mxu0 0.0
    %87 = vmatpush1.msra.mxu0 %v84
    %88 = vmatprep.subr.mxu0 0.0
    %89 = vmatpush1.msra.mxu0 0.0
    %90 = vmatprep.subr.mxu0 0.0
    %91 = vmatpush1.msra.mxu0 0.0
    %92 = vmatprep.subr.mxu0 0.0
    %93 = vmatpush1.msra.mxu0 0.0
    %94 = vmatprep.subr.mxu0 0.0
    %95 = vmatpush1.msra.mxu0 0.0
    %96 = vmatprep.subr.mxu0 0.0
    %97 = vmatpush1.msra.mxu0 0.0
    %98 = vmatprep.subr.mxu0 0.0
    %99 = vmatpush1.msra.mxu0 0.0
    %100 = vmatprep.subr.mxu0 0.0
    %101 = vmatpush1.msra.mxu0 0.0
    %102 = vmatprep.subr.mxu0 0.0
    %103 = vmatpush1.msra.mxu0 0.0
    %104 = vmatprep.subr.mxu0 0.0
    %105 = vmatpush1.msra.mxu0 0.0
    %106 = vmatprep.subr.mxu0 0.0
    %107 = vmatpush1.msra.mxu0 0.0
    %108 = vmatprep.subr.mxu0 0.0
    %109 = vmatpush1.msra.mxu0 0.0
    %110 = vmatprep.subr.mxu0 0.0
    %111 = vmatpush1.msra.mxu0 0.0
    %112 = vmatprep.subr.mxu0 0.0
    %113 = vmatpush1.msra.mxu0 0.0
    %114 = vmatprep.subr.mxu0 0.0
    %115 = vmatpush1.msra.mxu0 0.0
    %116 = vmatprep.subr.mxu0 0.0
    %117 = vmatpush1.msra.mxu0 0.0
    %118 = vmatprep.subr.mxu0 0.0
    %119 = vmatpush1.msra.mxu0 0.0
    %120 = vmatprep.subr.mxu0 0.0
    %121 = vmatpush1.msra.mxu0 0.0
    %122 = vmatprep.subr.mxu0 0.0
    %123 = vmatpush1.msra.mxu0 0.0
    %124 = vmatprep.subr.mxu0 0.0
    %125 = vmatpush1.msra.mxu0 0.0
    %126 = vmatprep.subr.mxu0 0.0
    %127 = vmatpush1.msra.mxu0 0.0
    %128 = vmatprep.subr.mxu0 0.0
    %129 = vmatpush1.msra.mxu0 0.0
    %130 = vmatprep.subr.mxu0 0.0
    %131 = vmatpush1.msra.mxu0 0.0
    %132 = vmatprep.subr.mxu0 0.0
    %133 = vmatpush1.msra.mxu0 0.0
    %134 = vmatprep.subr.mxu0 0.0
    %135 = vmatpush1.msra.mxu0 0.0
    %136 = vmatprep.subr.mxu0 0.0
    %137 = vmatpush1.msra.mxu0 0.0
    %138 = vmatprep.subr.mxu0 0.0
    %139 = vmatpush1.msra.mxu0 0.0
    %140 = vmatprep.subr.mxu0 0.0
    %141 = vmatpush1.msra.mxu0 0.0
    %142 = vmatprep.subr.mxu0 0.0
    %143 = vmatpush1.msra.mxu0 0.0
    %144 = vmatprep.subr.mxu0 0.0
    %145 = vmatpush1.msra.mxu0 0.0
    %146 = vmatprep.subr.mxu0 0.0
    %147 = vmatpush1.msra.mxu0 0.0
    %148 = vmatprep.subr.mxu0 0.0
    %149 = vmatpush1.msra.mxu0 0.0
    %150 = vmatprep.mubr.f32.mxu0 0.0
    %151 = vmatmul.mubr.f32.gmra.mrb[0].mxu0 %v80
    %v152 = vpop.f32.mrb[0].mxu0
    %v153 = vadd.f32 %v70, %v152
    %v154 = vpop.f32.mrb[0].mxu0
    %155 = vdwg.mxu0
    %v156 = vmax.f32 %v153, 0.0
    %v157 = vld [vmem:[%s3] sm:$0xff]
    %v158 = vld [vmem:[%s3 + $0x8] sm:$0xff]
    %v159 = vld [vmem:[%s4] sm:$0x1]
    %v161 = vlaneseq
    %v162 = vshrl.u32 %v161, 7
    %v163 = vsub.s32 0, %v162
    %v164 = vrot.slane %v159, %v163
    %vm166 = vcmask 130048
    %v168 = vsel %vm166, %v156, 0
    %170 = vmatprep.subr.mxu0 0.0
    %171 = vmatpush1.msra.mxu0 %v157
    %172 = vmatprep.subr.mxu0 0.0
    %173 = vmatpush1.msra.mxu0 %v158
    %174 = vmatprep.subr.mxu0 0.0
    %175 = vmatpush1.msra.mxu0 0.0
    %176 = vmatprep.subr.mxu0 0.0
    %177 = vmatpush1.msra.mxu0 0.0
    %178 = vmatprep.subr.mxu0 0.0
    %179 = vmatpush1.msra.mxu0 0.0
    %180 = vmatprep.subr.mxu0 0.0
    %181 = vmatpush1.msra.mxu0 0.0
    %182 = vmatprep.subr.mxu0 0.0
    %183 = vmatpush1.msra.mxu0 0.0
    %184 = vmatprep.subr.mxu0 0.0
    %185 = vmatpush1.msra.mxu0 0.0
    %186 = vmatprep.subr.mxu0 0.0
    %187 = vmatpush1.msra.mxu0 0.0
    %188 = vmatprep.subr.mxu0 0.0
    %189 = vmatpush1.msra.mxu0 0.0
    %190 = vmatprep.subr.mxu0 0.0
    %191 = vmatpush1.msra.mxu0 0.0
    %192 = vmatprep.subr.mxu0 0.0
    %193 = vmatpush1.msra.mxu0 0.0
    %194 = vmatprep.subr.mxu0 0.0
    %195 = vmatpush1.msra.mxu0 0.0
    %196 = vmatprep.subr.mxu0 0.0
    %197 = vmatpush1.msra.mxu0 0.0
    %198 = vmatprep.subr.mxu0 0.0
    %199 = vmatpush1.msra.mxu0 0.0
    %200 = vmatprep.subr.mxu0 0.0
    %201 = vmatpush1.msra.mxu0 0.0
    %202 = vmatprep.subr.mxu0 0.0
    %203 = vmatpush1.msra.mxu0 0.0
    %204 = vmatprep.subr.mxu0 0.0
    %205 = vmatpush1.msra.mxu0 0.0
    %206 = vmatprep.subr.mxu0 0.0
    %207 = vmatpush1.msra.mxu0 0.0
    %208 = vmatprep.subr.mxu0 0.0
    %209 = vmatpush1.msra.mxu0 0.0
    %210 = vmatprep.subr.mxu0 0.0
    %211 = vmatpush1.msra.mxu0 0.0
    %212 = vmatprep.subr.mxu0 0.0
    %213 = vmatpush1.msra.mxu0 0.0
    %214 = vmatprep.subr.mxu0 0.0
    %215 = vmatpush1.msra.mxu0 0.0
    %216 = vmatprep.subr.mxu0 0.0
    %217 = vmatpush1.msra.mxu0 0.0
    %218 = vmatprep.subr.mxu0 0.0
    %219 = vmatpush1.msra.mxu0 0.0
    %220 = vmatprep.subr.mxu0 0.0
    %221 = vmatpush1.msra.mxu0 0.0
    %222 = vmatprep.subr.mxu0 0.0
    %223 = vmatpush1.msra.mxu0 0.0
    %224 = vmatprep.subr.mxu0 0.0
    %225 = vmatpush1.msra.mxu0 0.0
    %226 = vmatprep.subr.mxu0 0.0
    %227 = vmatpush1.msra.mxu0 0.0
    %228 = vmatprep.subr.mxu0 0.0
    %229 = vmatpush1.msra.mxu0 0.0
    %230 = vmatprep.subr.mxu0 0.0
    %231 = vmatpush1.msra.mxu0 0.0
    %232 = vmatprep.subr.mxu0 0.0
    %233 = vmatpush1.msra.mxu0 0.0
    %234 = vmatprep.mubr.f32.mxu0 0.0
    %235 = vmatmul.mubr.f32.gmra.mrb[0].mxu0 %v168
    %v236 = vpop.f32.mrb[0].mxu0
    %v237 = vadd.f32 %v164, %v236
    %v238 = vpop.f32.mrb[0].mxu0
    %239 = vdwg.mxu0
    %v240 = vld [vmem:[%s5] sm:$0xff]
    %v241 = vld [vmem:[%s5 + $0x8] sm:$0xf]
    %v242 = vld [vmem:[%s6] sm:$0x1]
    %v244 = vlaneseq
    %v245 = vshrl.u32 %v244, 7
    %v246 = vsub.s32 0, %v245
    %v247 = vrot.slane %v242, %v246
    %vm249 = vcmask 97280
    %v251 = vsel %vm249, %v237, 0
    %vm253 = vcmask 1043456
    %v255 = vsel %vm253, %v241, 0
    %257 = vmatprep.subr.mxu0 0.0
    %258 = vmatpush1.msra.mxu0 %v240
    %259 = vmatprep.subr.mxu0 0.0
    %260 = vmatpush1.msra.mxu0 %v255
    %261 = vmatprep.subr.mxu0 0.0
    %262 = vmatpush1.msra.mxu0 0.0
    %263 = vmatprep.subr.mxu0 0.0
    %264 = vmatpush1.msra.mxu0 0.0
    %265 = vmatprep.subr.mxu0 0.0
    %266 = vmatpush1.msra.mxu0 0.0
    %267 = vmatprep.subr.mxu0 0.0
    %268 = vmatpush1.msra.mxu0 0.0
    %269 = vmatprep.subr.mxu0 0.0
    %270 = vmatpush1.msra.mxu0 0.0
    %271 = vmatprep.subr.mxu0 0.0
    %272 = vmatpush1.msra.mxu0 0.0
    %273 = vmatprep.subr.mxu0 0.0
    %274 = vmatpush1.msra.mxu0 0.0
    %275 = vmatprep.subr.mxu0 0.0
    %276 = vmatpush1.msra.mxu0 0.0
    %277 = vmatprep.subr.mxu0 0.0
    %278 = vmatpush1.msra.mxu0 0.0
    %279 = vmatprep.subr.mxu0 0.0
    %280 = vmatpush1.msra.mxu0 0.0
    %281 = vmatprep.subr.mxu0 0.0
    %282 = vmatpush1.msra.mxu0 0.0
    %283 = vmatprep.subr.mxu0 0.0
    %284 = vmatpush1.msra.mxu0 0.0
    %285 = vmatprep.subr.mxu0 0.0
    %286 = vmatpush1.msra.mxu0 0.0
    %287 = vmatprep.subr.mxu0 0.0
    %288 = vmatpush1.msra.mxu0 0.0
    %289 = vmatprep.subr.mxu0 0.0
    %290 = vmatpush1.msra.mxu0 0.0
    %291 = vmatprep.subr.mxu0 0.0
    %292 = vmatpush1.msra.mxu0 0.0
    %293 = vmatprep.subr.mxu0 0.0
    %294 = vmatpush1.msra.mxu0 0.0
    %295 = vmatprep.subr.mxu0 0.0
    %296 = vmatpush1.msra.mxu0 0.0
    %297 = vmatprep.subr.mxu0 0.0
    %298 = vmatpush1.msra.mxu0 0.0
    %299 = vmatprep.subr.mxu0 0.0
    %300 = vmatpush1.msra.mxu0 0.0
    %301 = vmatprep.subr.mxu0 0.0
    %302 = vmatpush1.msra.mxu0 0.0
    %303 = vmatprep.subr.mxu0 0.0
    %304 = vmatpush1.msra.mxu0 0.0
    %305 = vmatprep.subr.mxu0 0.0
    %306 = vmatpush1.msra.mxu0 0.0
    %307 = vmatprep.subr.mxu0 0.0
    %308 = vmatpush1.msra.mxu0 0.0
    %309 = vmatprep.subr.mxu0 0.0
    %310 = vmatpush1.msra.mxu0 0.0
    %311 = vmatprep.subr.mxu0 0.0
    %312 = vmatpush1.msra.mxu0 0.0
    %313 = vmatprep.subr.mxu0 0.0
    %314 = vmatpush1.msra.mxu0 0.0
    %315 = vmatprep.subr.mxu0 0.0
    %316 = vmatpush1.msra.mxu0 0.0
    %317 = vmatprep.subr.mxu0 0.0
    %318 = vmatpush1.msra.mxu0 0.0
    %319 = vmatprep.subr.mxu0 0.0
    %320 = vmatpush1.msra.mxu0 0.0
    %321 = vmatprep.mubr.f32.mxu0 0.0
    %322 = vmatmul.mubr.f32.gmra.mrb[0].mxu0 %v251
    %v323 = vpop.f32.mrb[0].mxu0
    %v324 = vadd.f32 %v247, %v323
    %v325 = vpop.f32.mrb[0].mxu0
    %326 = vdwg.mxu0
    %vm327 = vcmask 34816
    %328 = vst.msk [vmem:[#allocation5] sm:$0x7] %vm327, %v324
    // Predicated region
    $region34: #{tpu_custom_call.1} parent=1 // pred_check
      _
    $region35: #{tpu_custom_call.1} parent=1 // pred_check_branch
      %330 = sbr.rel (0) target = $region37
    $region36: #{tpu_custom_call.1} parent=1 // pred_region
      %s332 = ssub.s32 64, 64
      %333 = vsyncadd [#allocation4], %s332
      %s335 = sshll.u32 [#allocation5], 4
      %s336 = int_to_ptr.vmem [resolvable:$true] %s335
      %338 = dma.vmem_to_hbm [thread:$0]  %s336, 64, %s7, [#allocation4]
    $region37: #{tpu_custom_call.1} parent=1 // pred_fallthru
      _
    // Predicated region
    $region38: #{tpu_custom_call.1} parent=1 // pred_check
      _
    $region39: #{tpu_custom_call.1} parent=1 // pred_check_branch
      %340 = sbr.rel (0) target = $region41
    $region40: #{tpu_custom_call.1} parent=1 // pred_region
      %341 = dma.done [#allocation4], 64
    $region41: #{tpu_custom_call.1} parent=1 // pred_fallthru
      _
    %342 = vsyncpa [#allocation3], 1
    %343 = vsyncpa [#allocation4], 1

</llo_original>
